<compile_context>
chip_gen: v7x
topology: tpu7x:2x2x1
jax: 0.10.0
libtpu: 0.0.40
codegen_flags: <defaults>
</compile_context>

<pallas_src>
import jax
import jax.numpy as jnp
from jax.experimental import pallas as pl
from jax.experimental.pallas import tpu as pltpu

PACK = 16            # samples packed per lane-row (16 * hidden(8) = 128 lanes)
MIN_GRID_STEPS = 4   # keep >= 4 row-blocks so the parallel axis shards across TCs


def _round_up(x, m):
    return ((x + m - 1) // m) * m


def _predict_kernel(x_ref, w1_ref, b1_ref, w2_ref, b2_ref, o_ref):
    # x_ref:  (bm, PACK*D)   packed batch tile            (bf16)
    # w1_ref: (PACK*D, PACK*H) block-diagonal first layer  (bf16)
    # b1_ref: (1, PACK*H)    tiled bias                    (f32)
    # w2_ref: (PACK*H, PACK) block-diagonal second layer   (bf16)
    # b2_ref: (1, PACK)      tiled bias                    (f32)
    # o_ref:  (bm, PACK)     one scalar output per packed sample (f32)
    h = jnp.dot(x_ref[...], w1_ref[...],
                preferred_element_type=jnp.float32) + b1_ref[...]
    h = jnp.maximum(h, 0.0)  # ReLU; Dropout(p=0) is identity -> elided
    out = jnp.dot(h.astype(w2_ref.dtype), w2_ref[...],
                  preferred_element_type=jnp.float32) + b2_ref[...]
    o_ref[...] = out.astype(o_ref.dtype)


def predict_layer(x, w1, b1, w2, b2, *, block_m=2048):
    """x: (N, D) f32, w1: (D, 8), b1: (1, 8)|(8,), w2: (8, 1), b2: (1, 1)|(1,)
    -> (N, 1) f32."""
    N, D = x.shape
    H = w1.shape[1]
    out_dt = jnp.float32
    cdt = jnp.bfloat16  # streamed-operand dtype (HBM + MXU fast path)

    b1 = jnp.asarray(b1, out_dt).reshape(1, H)
    b2 = jnp.asarray(b2, out_dt).reshape(1, 1)

    # ---- lane-pack PACK samples per row (no full zero-pad copy when aligned) ----
    n16 = _round_up(N, PACK)
    xb = x.astype(cdt)
    if n16 != N:
        xb = jnp.zeros((n16, D), cdt).at[:N].set(xb)
    m_rows = n16 // PACK
    xp = xb.reshape(m_rows, PACK * D)          # row-major reshape: free, no copy

    eye = jnp.eye(PACK, dtype=cdt)
    w1p = jnp.kron(eye, w1.astype(cdt))        # (PACK*D, PACK*H) block-diagonal
    w2p = jnp.kron(eye, w2.astype(cdt))        # (PACK*H, PACK)   block-diagonal
    b1p = jnp.tile(b1, (1, PACK))              # (1, PACK*H) f32
    b2p = jnp.tile(b2, (1, PACK))              # (1, PACK)   f32

    # Row tile: multiple of 8, capped by block_m and so the grid keeps >= MIN steps.
    bm_req = _round_up(max(int(block_m), 8), 8)
    bm_cap = _round_up(max(pl.cdiv(m_rows, MIN_GRID_STEPS), 8), 8)
    bm = min(bm_req, bm_cap)
    grid = (pl.cdiv(m_rows, bm),)              # partial last block handled by Pallas

    out_packed = pl.pallas_call(
        _predict_kernel,
        out_shape=jax.ShapeDtypeStruct((m_rows, PACK), out_dt),
        grid_spec=pltpu.PrefetchScalarGridSpec(
            num_scalar_prefetch=0,
            grid=grid,
            in_specs=[
                pl.BlockSpec((bm, PACK * D), lambda i: (i, 0)),        # x tile
                pl.BlockSpec((PACK * D, PACK * H), lambda i: (0, 0)),  # W1p
                pl.BlockSpec((1, PACK * H), lambda i: (0, 0)),         # b1p
                pl.BlockSpec((PACK * H, PACK), lambda i: (0, 0)),      # W2p
                pl.BlockSpec((1, PACK), lambda i: (0, 0)),             # b2p
            ],
            out_specs=pl.BlockSpec((bm, PACK), lambda i: (i, 0)),
        ),
        compiler_params=pltpu.CompilerParams(
            dimension_semantics=("parallel",),
            vmem_limit_bytes=32 * 1024 * 1024,
        ),
    )(xp, w1p, b1p, w2p, b2p)

    # Un-pack: (m_rows, PACK) -> (n16, 1), drop the padded tail samples.
    return out_packed.reshape(n16, 1)[:N]


def predict_layer_ref(x, w1, b1, w2, b2):
    h = jnp.maximum(x @ w1 + b1.reshape(1, -1), 0.0)
    return h @ w2 + b2.reshape(1, 1)


if __name__ == "__main__":
    embedding_dim = 32

    key = jax.random.PRNGKey(0)
    kx, k1, k2, k3, k4, kx2, kx3 = jax.random.split(key, 7)

    # Deterministic synthetic parameters (shapes from PredictLayer.__init__).
    w1 = jax.random.normal(k1, (embedding_dim, 8), dtype=jnp.float32) * 0.1
    b1 = jax.random.normal(k2, (1, 8), dtype=jnp.float32) * 0.1
    w2 = jax.random.normal(k3, (8, 1), dtype=jnp.float32) * 0.1
    b2 = jax.random.normal(k4, (1, 1), dtype=jnp.float32) * 0.1

    # bf16 streamed operands -> compare against the f32 reference with ~1e-2 tol.
    TOL = dict(atol=2e-2, rtol=2e-2)

    # Case 1: batch NOT a multiple of PACK (exercises the small tail pad).
    batch = 19
    x = jax.random.normal(kx, (batch, embedding_dim), dtype=jnp.float32)
    out = jax.block_until_ready(predict_layer(x, w1, b1, w2, b2))
    ref = predict_layer_ref(x, w1, b1, w2, b2)
    assert out.shape == (batch, 1)
    assert jnp.allclose(out, ref, **TOL)

    # Case 2: multiple of PACK, small block_m -> multi-step grid, no pad copy.
    batch2 = 256
    x2 = jax.random.normal(kx2, (batch2, embedding_dim), dtype=jnp.float32)
    out2 = jax.block_until_ready(predict_layer(x2, w1, b1, w2, b2, block_m=8))
    ref2 = predict_layer_ref(x2, w1, b1, w2, b2)
    assert out2.shape == (batch2, 1)
    assert jnp.allclose(out2, ref2, **TOL)

    # Case 3: awkward batch -> partial last grid block (m_rows not multiple of bm).
    batch3 = 200
    x3 = jax.random.normal(kx3, (batch3, embedding_dim), dtype=jnp.float32)
    out3 = jax.block_until_ready(predict_layer(x3, w1, b1, w2, b2, block_m=8))
    ref3 = predict_layer_ref(x3, w1, b1, w2, b2)
    assert out3.shape == (batch3, 1)
    assert jnp.allclose(out3, ref3, **TOL)

    print("KERNEL_OK")
</pallas_src>

<mosaic_0001>
module attributes {stable_mosaic.version = 11 : i64} {
  func.func @_predict_kernel(%arg0: i32, %arg1: memref<8x512xbf16, #tpu.memory_space<vmem>>, %arg2: memref<512x128xbf16, #tpu.memory_space<vmem>>, %arg3: memref<1x128xf32, #tpu.memory_space<vmem>>, %arg4: memref<128x16xbf16, #tpu.memory_space<vmem>>, %arg5: memref<1x16xf32, #tpu.memory_space<vmem>>, %arg6: memref<8x16xf32, #tpu.memory_space<vmem>>) attributes {dimension_semantics = [#tpu.dimension_semantics<parallel>], iteration_bounds = array<i64: 1>, scalar_prefetch = 0 : i64, scratch_operands = 0 : i64, tpu.core_type = #tpu.core_type<tc>, window_params = [{transform_indices = @transform_0, window_bounds = array<i64: 8, 512>}, {pipeline_mode = #tpu.pipeline_mode<synchronous>, transform_indices = @transform_1, window_bounds = array<i64: 512, 128>}, {pipeline_mode = #tpu.pipeline_mode<synchronous>, transform_indices = @transform_2, window_bounds = array<i64: 1, 128>}, {pipeline_mode = #tpu.pipeline_mode<synchronous>, transform_indices = @transform_3, window_bounds = array<i64: 128, 16>}, {pipeline_mode = #tpu.pipeline_mode<synchronous>, transform_indices = @transform_4, window_bounds = array<i64: 1, 16>}, {transform_indices = @transform_5, window_bounds = array<i64: 8, 16>}]} {
    %c0 = arith.constant 0 : index
    %c0_0 = arith.constant 0 : index
    %0 = vector.load %arg1[%c0, %c0_0] : memref<8x512xbf16, #tpu.memory_space<vmem>>, vector<8x512xbf16>
    %c0_1 = arith.constant 0 : index
    %c0_2 = arith.constant 0 : index
    %1 = vector.load %arg2[%c0_1, %c0_2] : memref<512x128xbf16, #tpu.memory_space<vmem>>, vector<512x128xbf16>
    %cst = arith.constant dense<0.000000e+00> : vector<8x128xf32>
    %2 = tpu.matmul %0, %1, %cst {dimension_numbers = #tpu.dot_dimension_numbers<[1], [0], [0], [1], [0, 0, 1, 1], [], []>} : vector<8x512xbf16>, vector<512x128xbf16>, vector<8x128xf32> -> vector<8x128xf32>
    %c0_3 = arith.constant 0 : index
    %c0_4 = arith.constant 0 : index
    %3 = vector.load %arg3[%c0_3, %c0_4] : memref<1x128xf32, #tpu.memory_space<vmem>>, vector<1x128xf32>
    %4 = vector.broadcast %3 : vector<1x128xf32> to vector<8x128xf32>
    %5 = arith.addf %2, %4 : vector<8x128xf32>
    %cst_5 = arith.constant 0.000000e+00 : f32
    %6 = vector.broadcast %cst_5 : f32 to vector<8x128xf32>
    %7 = arith.maximumf %5, %6 : vector<8x128xf32>
    %8 = arith.truncf %7 : vector<8x128xf32> to vector<8x128xbf16>
    %c0_6 = arith.constant 0 : index
    %c0_7 = arith.constant 0 : index
    %9 = vector.load %arg4[%c0_6, %c0_7] : memref<128x16xbf16, #tpu.memory_space<vmem>>, vector<128x16xbf16>
    %cst_8 = arith.constant dense<0.000000e+00> : vector<8x16xf32>
    %10 = tpu.matmul %8, %9, %cst_8 {dimension_numbers = #tpu.dot_dimension_numbers<[1], [0], [0], [1], [0, 0, 1, 1], [], []>} : vector<8x128xbf16>, vector<128x16xbf16>, vector<8x16xf32> -> vector<8x16xf32>
    %c0_9 = arith.constant 0 : index
    %c0_10 = arith.constant 0 : index
    %11 = vector.load %arg5[%c0_9, %c0_10] : memref<1x16xf32, #tpu.memory_space<vmem>>, vector<1x16xf32>
    %12 = vector.broadcast %11 : vector<1x16xf32> to vector<8x16xf32>
    %13 = arith.addf %10, %12 : vector<8x16xf32>
    %c0_11 = arith.constant 0 : index
    %c0_12 = arith.constant 0 : index
    %14 = vector.load %arg6[%c0_11, %c0_12] : memref<8x16xf32, #tpu.memory_space<vmem>>, vector<8x16xf32>
    tpu.vector_store %arg6[%c0_11, %c0_12], %13 {strides = array<i32>} : memref<8x16xf32, #tpu.memory_space<vmem>>, vector<8x16xf32>,
    return
  }
  func.func @transform_0(%arg0: i32) -> (i32, i32) {
    %c0_i32 = arith.constant 0 : i32
    %c0_i32_0 = arith.constant 0 : i32
    return %arg0, %c0_i32 : i32, i32
  }
  func.func @transform_1(%arg0: i32) -> (i32, i32) {
    %c0_i32 = arith.constant 0 : i32
    %c0_i32_0 = arith.constant 0 : i32
    %c0_i32_1 = arith.constant 0 : i32
    return %c0_i32, %c0_i32_0 : i32, i32
  }
  func.func @transform_2(%arg0: i32) -> (i32, i32) {
    %c0_i32 = arith.constant 0 : i32
    %c0_i32_0 = arith.constant 0 : i32
    %c0_i32_1 = arith.constant 0 : i32
    return %c0_i32, %c0_i32_0 : i32, i32
  }
  func.func @transform_3(%arg0: i32) -> (i32, i32) {
    %c0_i32 = arith.constant 0 : i32
    %c0_i32_0 = arith.constant 0 : i32
    %c0_i32_1 = arith.constant 0 : i32
    return %c0_i32, %c0_i32_0 : i32, i32
  }
  func.func @transform_4(%arg0: i32) -> (i32, i32) {
    %c0_i32 = arith.constant 0 : i32
    %c0_i32_0 = arith.constant 0 : i32
    %c0_i32_1 = arith.constant 0 : i32
    return %c0_i32, %c0_i32_0 : i32, i32
  }
  func.func @transform_5(%arg0: i32) -> (i32, i32) {
    %c0_i32 = arith.constant 0 : i32
    %c0_i32_0 = arith.constant 0 : i32
    return %arg0, %c0_i32 : i32, i32
  }
}

</mosaic_0001>

<llo_original>
// kernel: tpu_custom_call.1
$region0: #{tpu_custom_call.1}
  #allocation0 [shape = 'u32[]', space=smem, size = 0x4, offset = 0x4, fixed_abs, tag = 'smem constant byte address 0x4 - core index']
  #allocation1 [shape = 'u32[144,128]{1,0:T(1,128)}', space=vmem, size = 0x12000, scoped, tag = 'internal scratch']
  %s0 = inlined_call_operand.vmem [shape: bf16[2,512], index: 0, kind: input, shape index: {}]
  %s1 = inlined_call_operand.hbm [shape: bf16[512,128], index: 1, kind: input, shape index: {}]
  %s2 = inlined_call_operand.vmem [shape: f32[1,128], index: 2, kind: input, shape index: {}]
  %s3 = inlined_call_operand.vmem [shape: bf16[128,16], index: 3, kind: input, shape index: {}]
  %s4 = inlined_call_operand.vmem [shape: f32[1,16], index: 4, kind: input, shape index: {}]
  %s5 = inlined_call_operand.hbm [shape: f32[2,16], index: 5, kind: output, shape index: {}]
  %s6 = sld [smem:[#allocation0]]
  $region34: #{tpu_custom_call.1} parent=0
    _
  %s8 = ssub.s32 1, %s6
  %s9 = scalar_select 0, %s8, %s6
  $region1: #{tpu_custom_call.1} parent=0
    #allocation2 [shape = 'u8[131072]{0}', space=vmem, size = 0x20000, scoped, tag = 'input window, operand 1, single buffered']
    #allocation3 [shape = 's32[1]{0}', space=sflag, size = 0x4, scoped, tag = 'scoped memory for tpu_custom_call.1']
    #allocation4 [shape = 's32[1]{0}', space=sflag, size = 0x4, scoped, tag = 'scoped memory for tpu_custom_call.1']
    #allocation5 [shape = 'u8[4096]{0}', space=vmem, size = 0x1000, scoped, tag = 'output window, operand 0, single buffered']
    %10 = vsyncpa [#allocation3], 0
    %11 = vsyncpa [#allocation4], 0
    // Predicated region
    $region2: #{tpu_custom_call.1} parent=1 // pred_check
      _
    $region3: #{tpu_custom_call.1} parent=1 // pred_check_branch
      %13 = sbr.rel (0) target = $region5
    $region4: #{tpu_custom_call.1} parent=1 // pred_region
      _
    $region5: #{tpu_custom_call.1} parent=1 // pred_fallthru
      _
    // Predicated region
    $region6: #{tpu_custom_call.1} parent=1 // pred_check
      _
    $region7: #{tpu_custom_call.1} parent=1 // pred_check_branch
      %15 = sbr.rel (0) target = $region9
    $region8: #{tpu_custom_call.1} parent=1 // pred_region
      %s17 = ssub.s32 4096, 4096
      %18 = vsyncadd [#allocation3], %s17
      %s19 = sshll.u32 [#allocation2], 4
      %s20 = int_to_ptr.vmem [resolvable:$true] %s19
      %25 = dma.hbm_to_vmem [thread:$0]  %s1, 4096, %s20, [#allocation3], 64, 64, 4
    $region9: #{tpu_custom_call.1} parent=1 // pred_fallthru
      _
    // Predicated region
    $region10: #{tpu_custom_call.1} parent=1 // pred_check
      _
    $region11: #{tpu_custom_call.1} parent=1 // pred_check_branch
      %27 = sbr.rel (0) target = $region13
    $region12: #{tpu_custom_call.1} parent=1 // pred_region
      _
    $region13: #{tpu_custom_call.1} parent=1 // pred_fallthru
      _
    // Predicated region
    $region14: #{tpu_custom_call.1} parent=1 // pred_check
      _
    $region15: #{tpu_custom_call.1} parent=1 // pred_check_branch
      %29 = sbr.rel (0) target = $region17
    $region16: #{tpu_custom_call.1} parent=1 // pred_region
      _
    $region17: #{tpu_custom_call.1} parent=1 // pred_fallthru
      _
    // Predicated region
    $region18: #{tpu_custom_call.1} parent=1 // pred_check
      _
    $region19: #{tpu_custom_call.1} parent=1 // pred_check_branch
      %31 = sbr.rel (0) target = $region21
    $region20: #{tpu_custom_call.1} parent=1 // pred_region
      _
    $region21: #{tpu_custom_call.1} parent=1 // pred_fallthru
      _
    // Predicated region
    $region22: #{tpu_custom_call.1} parent=1 // pred_check
      _
    $region23: #{tpu_custom_call.1} parent=1 // pred_check_branch
      %33 = sbr.rel (0) target = $region25
    $region24: #{tpu_custom_call.1} parent=1 // pred_region
      %34 = dma.done [#allocation3], 4096
    $region25: #{tpu_custom_call.1} parent=1 // pred_fallthru
      _
    %v36 = vld [vmem:[%s0] sm:$0xf]
    %v37 = vld [vmem:[%s0 + $0x4] sm:$0xf]
    %v38 = vld [vmem:[%s0 + $0x8] sm:$0xf]
    %v39 = vld [vmem:[%s0 + $0xc] sm:$0xf]
    %v40 = vld [vmem:[#allocation2] sm:$0xf]
    %v41 = vld [vmem:[#allocation2 + $0x4] sm:$0xf]
    %v42 = vld [vmem:[#allocation2 + $0x8] sm:$0xf]
    %v43 = vld [vmem:[#allocation2 + $0xc] sm:$0xf]
    %v44 = vld [vmem:[#allocation2 + $0x10] sm:$0xf]
    %v45 = vld [vmem:[#allocation2 + $0x14] sm:$0xf]
    %v46 = vld [vmem:[#allocation2 + $0x18] sm:$0xf]
    %v47 = vld [vmem:[#allocation2 + $0x1c] sm:$0xf]
    %v48 = vld [vmem:[#allocation2 + $0x20] sm:$0xf]
    %v49 = vld [vmem:[#allocation2 + $0x24] sm:$0xf]
    %v50 = vld [vmem:[#allocation2 + $0x28] sm:$0xf]
    %v51 = vld [vmem:[#allocation2 + $0x2c] sm:$0xf]
    %v52 = vld [vmem:[#allocation2 + $0x30] sm:$0xf]
    %v53 = vld [vmem:[#allocation2 + $0x34] sm:$0xf]
    %v54 = vld [vmem:[#allocation2 + $0x38] sm:$0xf]
    %v55 = vld [vmem:[#allocation2 + $0x3c] sm:$0xf]
    %v56 = vld [vmem:[#allocation2 + $0x40] sm:$0xf]
    %v57 = vld [vmem:[#allocation2 + $0x44] sm:$0xf]
    %v58 = vld [vmem:[#allocation2 + $0x48] sm:$0xf]
    %v59 = vld [vmem:[#allocation2 + $0x4c] sm:$0xf]
    %v60 = vld [vmem:[#allocation2 + $0x50] sm:$0xf]
    %v61 = vld [vmem:[#allocation2 + $0x54] sm:$0xf]
    %v62 = vld [vmem:[#allocation2 + $0x58] sm:$0xf]
    %v63 = vld [vmem:[#allocation2 + $0x5c] sm:$0xf]
    %v64 = vld [vmem:[#allocation2 + $0x60] sm:$0xf]
    %v65 = vld [vmem:[#allocation2 + $0x64] sm:$0xf]
    %v66 = vld [vmem:[#allocation2 + $0x68] sm:$0xf]
    %v67 = vld [vmem:[#allocation2 + $0x6c] sm:$0xf]
    %v68 = vld [vmem:[#allocation2 + $0x70] sm:$0xf]
    %v69 = vld [vmem:[#allocation2 + $0x74] sm:$0xf]
    %v70 = vld [vmem:[#allocation2 + $0x78] sm:$0xf]
    %v71 = vld [vmem:[#allocation2 + $0x7c] sm:$0xf]
    %v72 = vld [vmem:[#allocation2 + $0x80] sm:$0xf]
    %v73 = vld [vmem:[#allocation2 + $0x84] sm:$0xf]
    %v74 = vld [vmem:[#allocation2 + $0x88] sm:$0xf]
    %v75 = vld [vmem:[#allocation2 + $0x8c] sm:$0xf]
    %v76 = vld [vmem:[#allocation2 + $0x90] sm:$0xf]
    %v77 = vld [vmem:[#allocation2 + $0x94] sm:$0xf]
    %v78 = vld [vmem:[#allocation2 + $0x98] sm:$0xf]
    %v79 = vld [vmem:[#allocation2 + $0x9c] sm:$0xf]
    %v80 = vld [vmem:[#allocation2 + $0xa0] sm:$0xf]
    %v81 = vld [vmem:[#allocation2 + $0xa4] sm:$0xf]
    %v82 = vld [vmem:[#allocation2 + $0xa8] sm:$0xf]
    %v83 = vld [vmem:[#allocation2 + $0xac] sm:$0xf]
    %v84 = vld [vmem:[#allocation2 + $0xb0] sm:$0xf]
    %v85 = vld [vmem:[#allocation2 + $0xb4] sm:$0xf]
    %v86 = vld [vmem:[#allocation2 + $0xb8] sm:$0xf]
    %v87 = vld [vmem:[#allocation2 + $0xbc] sm:$0xf]
    %v88 = vld [vmem:[#allocation2 + $0xc0] sm:$0xf]
    %v89 = vld [vmem:[#allocation2 + $0xc4] sm:$0xf]
    %v90 = vld [vmem:[#allocation2 + $0xc8] sm:$0xf]
    %v91 = vld [vmem:[#allocation2 + $0xcc] sm:$0xf]
    %v92 = vld [vmem:[#allocation2 + $0xd0] sm:$0xf]
    %v93 = vld [vmem:[#allocation2 + $0xd4] sm:$0xf]
    %v94 = vld [vmem:[#allocation2 + $0xd8] sm:$0xf]
    %v95 = vld [vmem:[#allocation2 + $0xdc] sm:$0xf]
    %v96 = vld [vmem:[#allocation2 + $0xe0] sm:$0xf]
    %v97 = vld [vmem:[#allocation2 + $0xe4] sm:$0xf]
    %v98 = vld [vmem:[#allocation2 + $0xe8] sm:$0xf]
    %v99 = vld [vmem:[#allocation2 + $0xec] sm:$0xf]
    %v100 = vld [vmem:[#allocation2 + $0xf0] sm:$0xf]
    %v101 = vld [vmem:[#allocation2 + $0xf4] sm:$0xf]
    %v102 = vld [vmem:[#allocation2 + $0xf8] sm:$0xf]
    %v103 = vld [vmem:[#allocation2 + $0xfc] sm:$0xf]
    %v104 = vld [vmem:[%s2] sm:$0x1]
    %v106 = vlaneseq
    %v107 = vshrl.u32 %v106, 7
    %v108 = vsub.s32 0, %v107
    %v109 = vrot.slane %v104, %v108
    %v115 = vcombine.low %v36, %v37
    %v116 = vcombine.low %v38, %v39
    %v118 = vunpack.c.l.s4 1966171168
    %v119 = vunpack.c.0.s8 %v118
    %v120 = vlaneseq
    %v121 = vshrl.u32 %v120, 7
    %v122 = vsub.s32 %v119, %v121
    %v123 = vrot.slane %v115, %v122
    %v125 = vunpack.c.l.s4 1966171168
    %v126 = vunpack.c.0.s8 %v125
    %v127 = vlaneseq
    %v128 = vshrl.u32 %v127, 7
    %v129 = vsub.s32 %v126, %v128
    %v130 = vrot.slane %v116, %v129
    %v131 = vcombine.low %v123, %v130
    %v132 = vcombine.high %v123, %v130
    %v134 = vunpack.c.l.s4 1966171168
    %v135 = vunpack.c.0.s8 %v134
    %v136 = vlaneseq
    %v137 = vshrl.u32 %v136, 7
    %v138 = vsub.s32 %v135, %v137
    %v139 = vrot.slane %v131, %v138
    %v141 = vunpack.c.l.s4 1966171168
    %v142 = vunpack.c.0.s8 %v141
    %v143 = vlaneseq
    %v144 = vshrl.u32 %v143, 7
    %v145 = vsub.s32 %v142, %v144
    %v146 = vrot.slane %v132, %v145
    %v147 = vcombine.high %v139, %v139
    %v148 = vcombine.high %v146, %v146
    %v217 = vunpack.c.l.b16 %v40
    %v218 = vunpack.c.l.b16 %v41
    %v219 = vunpack.c.l.b16 %v42
    %v220 = vunpack.c.l.b16 %v43
    %v221 = vunpack.c.l.b16 %v44
    %v222 = vunpack.c.l.b16 %v45
    %v223 = vunpack.c.l.b16 %v46
    %v224 = vunpack.c.l.b16 %v47
    %v225 = vunpack.c.l.b16 %v48
    %v226 = vunpack.c.l.b16 %v49
    %v227 = vunpack.c.l.b16 %v50
    %v228 = vunpack.c.l.b16 %v51
    %v229 = vunpack.c.l.b16 %v52
    %v230 = vunpack.c.l.b16 %v53
    %v231 = vunpack.c.l.b16 %v54
    %v232 = vunpack.c.l.b16 %v55
    %v233 = vunpack.c.l.b16 %v56
    %v234 = vunpack.c.l.b16 %v57
    %v235 = vunpack.c.l.b16 %v58
    %v236 = vunpack.c.l.b16 %v59
    %v237 = vunpack.c.l.b16 %v60
    %v238 = vunpack.c.l.b16 %v61
    %v239 = vunpack.c.l.b16 %v62
    %v240 = vunpack.c.l.b16 %v63
    %v241 = vunpack.c.l.b16 %v64
    %v242 = vunpack.c.l.b16 %v65
    %v243 = vunpack.c.l.b16 %v66
    %v244 = vunpack.c.l.b16 %v67
    %v245 = vunpack.c.l.b16 %v68
    %v246 = vunpack.c.l.b16 %v69
    %v247 = vunpack.c.l.b16 %v70
    %v248 = vunpack.c.l.b16 %v71
    %v249 = vunpack.c.l.b16 %v72
    %v250 = vunpack.c.l.b16 %v73
    %v251 = vunpack.c.l.b16 %v74
    %v252 = vunpack.c.l.b16 %v75
    %v253 = vunpack.c.l.b16 %v76
    %v254 = vunpack.c.l.b16 %v77
    %v255 = vunpack.c.l.b16 %v78
    %v256 = vunpack.c.l.b16 %v79
    %v257 = vunpack.c.l.b16 %v80
    %v258 = vunpack.c.l.b16 %v81
    %v259 = vunpack.c.l.b16 %v82
    %v260 = vunpack.c.l.b16 %v83
    %v261 = vunpack.c.l.b16 %v84
    %v262 = vunpack.c.l.b16 %v85
    %v263 = vunpack.c.l.b16 %v86
    %v264 = vunpack.c.l.b16 %v87
    %v265 = vunpack.c.l.b16 %v88
    %v266 = vunpack.c.l.b16 %v89
    %v267 = vunpack.c.l.b16 %v90
    %v268 = vunpack.c.l.b16 %v91
    %v269 = vunpack.c.l.b16 %v92
    %v270 = vunpack.c.l.b16 %v93
    %v271 = vunpack.c.l.b16 %v94
    %v272 = vunpack.c.l.b16 %v95
    %v273 = vunpack.c.l.b16 %v96
    %v274 = vunpack.c.l.b16 %v97
    %v275 = vunpack.c.l.b16 %v98
    %v276 = vunpack.c.l.b16 %v99
    %v277 = vunpack.c.l.b16 %v100
    %v278 = vunpack.c.l.b16 %v101
    %v279 = vunpack.c.l.b16 %v102
    %v280 = vunpack.c.l.b16 %v103
    %v281 = vpack.c.b16 %v218, %v217
    %v282 = vpack.c.b16 %v220, %v219
    %v283 = vpack.c.b16 %v222, %v221
    %v284 = vpack.c.b16 %v224, %v223
    %v285 = vpack.c.b16 %v226, %v225
    %v286 = vpack.c.b16 %v228, %v227
    %v287 = vpack.c.b16 %v230, %v229
    %v288 = vpack.c.b16 %v232, %v231
    %v289 = vpack.c.b16 %v234, %v233
    %v290 = vpack.c.b16 %v236, %v235
    %v291 = vpack.c.b16 %v238, %v237
    %v292 = vpack.c.b16 %v240, %v239
    %v293 = vpack.c.b16 %v242, %v241
    %v294 = vpack.c.b16 %v244, %v243
    %v295 = vpack.c.b16 %v246, %v245
    %v296 = vpack.c.b16 %v248, %v247
    %v297 = vpack.c.b16 %v250, %v249
    %v298 = vpack.c.b16 %v252, %v251
    %v299 = vpack.c.b16 %v254, %v253
    %v300 = vpack.c.b16 %v256, %v255
    %v301 = vpack.c.b16 %v258, %v257
    %v302 = vpack.c.b16 %v260, %v259
    %v303 = vpack.c.b16 %v262, %v261
    %v304 = vpack.c.b16 %v264, %v263
    %v305 = vpack.c.b16 %v266, %v265
    %v306 = vpack.c.b16 %v268, %v267
    %v307 = vpack.c.b16 %v270, %v269
    %v308 = vpack.c.b16 %v272, %v271
    %v309 = vpack.c.b16 %v274, %v273
    %v310 = vpack.c.b16 %v276, %v275
    %v311 = vpack.c.b16 %v278, %v277
    %v312 = vpack.c.b16 %v280, %v279
    %345 = vmatprep.subr.bf16.mxu0 0
    %346 = vmatpush1.bf16.msra.mxu0 %v281
    %347 = vmatprep.subr.bf16.mxu0 0
    %348 = vmatpush1.bf16.msra.mxu0 %v282
    %349 = vmatprep.subr.bf16.mxu0 0
    %350 = vmatpush1.bf16.msra.mxu0 %v283
    %351 = vmatprep.subr.bf16.mxu0 0
    %352 = vmatpush1.bf16.msra.mxu0 %v284
    %353 = vmatprep.subr.bf16.mxu0 0
    %354 = vmatpush1.bf16.msra.mxu0 %v285
    %355 = vmatprep.subr.bf16.mxu0 0
    %356 = vmatpush1.bf16.msra.mxu0 %v286
    %357 = vmatprep.subr.bf16.mxu0 0
    %358 = vmatpush1.bf16.msra.mxu0 %v287
    %359 = vmatprep.subr.bf16.mxu0 0
    %360 = vmatpush1.bf16.msra.mxu0 %v288
    %361 = vmatprep.subr.bf16.mxu0 0
    %362 = vmatpush1.bf16.msra.mxu0 %v289
    %363 = vmatprep.subr.bf16.mxu0 0
    %364 = vmatpush1.bf16.msra.mxu0 %v290
    %365 = vmatprep.subr.bf16.mxu0 0
    %366 = vmatpush1.bf16.msra.mxu0 %v291
    %367 = vmatprep.subr.bf16.mxu0 0
    %368 = vmatpush1.bf16.msra.mxu0 %v292
    %369 = vmatprep.subr.bf16.mxu0 0
    %370 = vmatpush1.bf16.msra.mxu0 %v293
    %371 = vmatprep.subr.bf16.mxu0 0
    %372 = vmatpush1.bf16.msra.mxu0 %v294
    %373 = vmatprep.subr.bf16.mxu0 0
    %374 = vmatpush1.bf16.msra.mxu0 %v295
    %375 = vmatprep.subr.bf16.mxu0 0
    %376 = vmatpush1.bf16.msra.mxu0 %v296
    %377 = vmatprep.mubr.bf16.mxu0 %v146
    %378 = vmatmul.mubr.bf16.gmra.mrb[0].mxu0 %v139
    %v379 = vpop.f32.mrb[0].mxu0
    %v380 = vadd.f32 %v109, %v379
    %v381 = vpop.f32.mrb[0].mxu0
    %v382 = vpop.f32.mrb[0].mxu0
    %v383 = vpop.f32.mrb[0].mxu0
    %384 = vdwg.mxu0
    %385 = vmatprep.subr.bf16.mxu0 0
    %386 = vmatpush1.bf16.msra.mxu0 %v297
    %387 = vmatprep.subr.bf16.mxu0 0
    %388 = vmatpush1.bf16.msra.mxu0 %v298
    %389 = vmatprep.subr.bf16.mxu0 0
    %390 = vmatpush1.bf16.msra.mxu0 %v299
    %391 = vmatprep.subr.bf16.mxu0 0
    %392 = vmatpush1.bf16.msra.mxu0 %v300
    %393 = vmatprep.subr.bf16.mxu0 0
    %394 = vmatpush1.bf16.msra.mxu0 %v301
    %395 = vmatprep.subr.bf16.mxu0 0
    %396 = vmatpush1.bf16.msra.mxu0 %v302
    %397 = vmatprep.subr.bf16.mxu0 0
    %398 = vmatpush1.bf16.msra.mxu0 %v303
    %399 = vmatprep.subr.bf16.mxu0 0
    %400 = vmatpush1.bf16.msra.mxu0 %v304
    %401 = vmatprep.subr.bf16.mxu0 0
    %402 = vmatpush1.bf16.msra.mxu0 %v305
    %403 = vmatprep.subr.bf16.mxu0 0
    %404 = vmatpush1.bf16.msra.mxu0 %v306
    %405 = vmatprep.subr.bf16.mxu0 0
    %406 = vmatpush1.bf16.msra.mxu0 %v307
    %407 = vmatprep.subr.bf16.mxu0 0
    %408 = vmatpush1.bf16.msra.mxu0 %v308
    %409 = vmatprep.subr.bf16.mxu0 0
    %410 = vmatpush1.bf16.msra.mxu0 %v309
    %411 = vmatprep.subr.bf16.mxu0 0
    %412 = vmatpush1.bf16.msra.mxu0 %v310
    %413 = vmatprep.subr.bf16.mxu0 0
    %414 = vmatpush1.bf16.msra.mxu0 %v311
    %415 = vmatprep.subr.bf16.mxu0 0
    %416 = vmatpush1.bf16.msra.mxu0 %v312
    %417 = vmatprep.mubr.bf16.mxu0 %v148
    %418 = vmatmul.mubr.bf16.gmra.mrb[0].mxu0 %v147
    %v419 = vpop.f32.mrb[0].mxu0
    %v420 = vadd.f32 %v380, %v419
    %v421 = vpop.f32.mrb[0].mxu0
    %v422 = vpop.f32.mrb[0].mxu0
    %v423 = vpop.f32.mrb[0].mxu0
    %424 = vdwg.mxu0
    %v425 = vmax.f32 %v420, 0.0
    %v426 = vpack.c.bf16 %v425, %v425
    %v427 = vld [vmem:[%s3] sm:$0xf]
    %v428 = vld [vmem:[%s3 + $0x4] sm:$0xf]
    %v429 = vld [vmem:[%s3 + $0x8] sm:$0xf]
    %v430 = vld [vmem:[%s3 + $0xc] sm:$0xf]
    %v431 = vld [vmem:[%s3 + $0x10] sm:$0xf]
    %v432 = vld [vmem:[%s3 + $0x14] sm:$0xf]
    %v433 = vld [vmem:[%s3 + $0x18] sm:$0xf]
    %v434 = vld [vmem:[%s3 + $0x1c] sm:$0xf]
    %v435 = vld [vmem:[%s3 + $0x20] sm:$0xf]
    %v436 = vld [vmem:[%s3 + $0x24] sm:$0xf]
    %v437 = vld [vmem:[%s3 + $0x28] sm:$0xf]
    %v438 = vld [vmem:[%s3 + $0x2c] sm:$0xf]
    %v439 = vld [vmem:[%s3 + $0x30] sm:$0xf]
    %v440 = vld [vmem:[%s3 + $0x34] sm:$0xf]
    %v441 = vld [vmem:[%s3 + $0x38] sm:$0xf]
    %v442 = vld [vmem:[%s3 + $0x3c] sm:$0xf]
    %v443 = vld [vmem:[%s4] sm:$0x1]
    %v445 = vlaneseq
    %v446 = vshrl.u32 %v445, 7
    %v447 = vsub.s32 0, %v446
    %v448 = vrot.slane %v443, %v447
    %v466 = vunpack.c.l.b16 %v427
    %v467 = vunpack.c.l.b16 %v428
    %v468 = vunpack.c.l.b16 %v429
    %v469 = vunpack.c.l.b16 %v430
    %v470 = vunpack.c.l.b16 %v431
    %v471 = vunpack.c.l.b16 %v432
    %v472 = vunpack.c.l.b16 %v433
    %v473 = vunpack.c.l.b16 %v434
    %v474 = vunpack.c.l.b16 %v435
    %v475 = vunpack.c.l.b16 %v436
    %v476 = vunpack.c.l.b16 %v437
    %v477 = vunpack.c.l.b16 %v438
    %v478 = vunpack.c.l.b16 %v439
    %v479 = vunpack.c.l.b16 %v440
    %v480 = vunpack.c.l.b16 %v441
    %v481 = vunpack.c.l.b16 %v442
    %v482 = vpack.c.b16 %v467, %v466
    %v483 = vpack.c.b16 %v469, %v468
    %v484 = vpack.c.b16 %v471, %v470
    %v485 = vpack.c.b16 %v473, %v472
    %v486 = vpack.c.b16 %v475, %v474
    %v487 = vpack.c.b16 %v477, %v476
    %v488 = vpack.c.b16 %v479, %v478
    %v489 = vpack.c.b16 %v481, %v480
    %498 = vmatprep.subr.bf16.mxu0 0
    %499 = vmatpush1.bf16.msra.mxu0 %v482
    %500 = vmatprep.subr.bf16.mxu0 0
    %501 = vmatpush1.bf16.msra.mxu0 %v483
    %502 = vmatprep.subr.bf16.mxu0 0
    %503 = vmatpush1.bf16.msra.mxu0 %v484
    %504 = vmatprep.subr.bf16.mxu0 0
    %505 = vmatpush1.bf16.msra.mxu0 %v485
    %506 = vmatprep.subr.bf16.mxu0 0
    %507 = vmatpush1.bf16.msra.mxu0 %v486
    %508 = vmatprep.subr.bf16.mxu0 0
    %509 = vmatpush1.bf16.msra.mxu0 %v487
    %510 = vmatprep.subr.bf16.mxu0 0
    %511 = vmatpush1.bf16.msra.mxu0 %v488
    %512 = vmatprep.subr.bf16.mxu0 0
    %513 = vmatpush1.bf16.msra.mxu0 %v489
    %514 = vmatprep.subr.bf16.mxu0 0
    %515 = vmatpush1.bf16.msra.mxu0 0
    %516 = vmatprep.subr.bf16.mxu0 0
    %517 = vmatpush1.bf16.msra.mxu0 0
    %518 = vmatprep.subr.bf16.mxu0 0
    %519 = vmatpush1.bf16.msra.mxu0 0
    %520 = vmatprep.subr.bf16.mxu0 0
    %521 = vmatpush1.bf16.msra.mxu0 0
    %522 = vmatprep.subr.bf16.mxu0 0
    %523 = vmatpush1.bf16.msra.mxu0 0
    %524 = vmatprep.subr.bf16.mxu0 0
    %525 = vmatpush1.bf16.msra.mxu0 0
    %526 = vmatprep.subr.bf16.mxu0 0
    %527 = vmatpush1.bf16.msra.mxu0 0
    %528 = vmatprep.subr.bf16.mxu0 0
    %529 = vmatpush1.bf16.msra.mxu0 0
    %530 = vmatprep.mubr.bf16.mxu0 0
    %531 = vmatmul.mubr.bf16.gmra.mrb[0].mxu0 %v426
    %v532 = vpop.f32.mrb[0].mxu0
    %v533 = vadd.f32 %v448, %v532
    %v534 = vpop.f32.mrb[0].mxu0
    %v535 = vpop.f32.mrb[0].mxu0
    %v536 = vpop.f32.mrb[0].mxu0
    %537 = vdwg.mxu0
    %vm538 = vcmask 130048
    %539 = vst.msk [vmem:[#allocation5] sm:$0xff] %vm538, %v533
    // Predicated region
    $region26: #{tpu_custom_call.1} parent=1 // pred_check
      _
    $region27: #{tpu_custom_call.1} parent=1 // pred_check_branch
      %541 = sbr.rel (0) target = $region29
    $region28: #{tpu_custom_call.1} parent=1 // pred_region
      %s543 = ssub.s32 128, 32
      %544 = vsyncadd [#allocation4], %s543
      %s545 = sshll.u32 [#allocation5], 4
      %s546 = int_to_ptr.vmem [resolvable:$true] %s545
      %551 = dma.vmem_to_hbm [thread:$0]  %s546, 32, %s5, [#allocation4], 32, 32, 2
    $region29: #{tpu_custom_call.1} parent=1 // pred_fallthru
      _
    // Predicated region
    $region30: #{tpu_custom_call.1} parent=1 // pred_check
      _
    $region31: #{tpu_custom_call.1} parent=1 // pred_check_branch
      %553 = sbr.rel (0) target = $region33
    $region32: #{tpu_custom_call.1} parent=1 // pred_region
      %554 = dma.done [#allocation4], 128
    $region33: #{tpu_custom_call.1} parent=1 // pred_fallthru
      _
    %555 = vsyncpa [#allocation3], 1
    %556 = vsyncpa [#allocation4], 1

</llo_original>
